<compile_context>
chip_gen: v5e
topology: v5e:2x2
jax: 0.10.0
libtpu: 0.0.40
codegen_flags: <defaults>
</compile_context>

<pallas_src>
import numpy as np

import jax
import jax.numpy as jnp
from jax import lax
from jax.experimental import pallas as pl
from jax.experimental.pallas import tpu as pltpu


# ----------------------------------------------------------------------------
# Single pass: fused upsample + 3x3 conv (3 accumulated MXU matmuls) + BN partials
# ----------------------------------------------------------------------------
def _upconv_stats_kernel(x_ref, w_ref, conv_ref, stats_ref):
    # x_ref    : (TI+2, (W+2)*Cin)  bf16  zero-padded input rows (+1-row halo);
    #                                     W and Cin folded together on lanes.
    # w_ref    : (3, (W+2)*Cin, L)  bf16  row-folded weight, L = W*4*Cout.
    # conv_ref : (TI, L)            bf16  pre-BN conv output (lane-dense).
    # stats_ref: (2, L)             f32   per-lane [sum ; sum of squares] partials.
    ti = conv_ref.shape[0]

    # One accumulated matmul per row tap (dr = 0, 1, 2).  Column taps + phases +
    # output column live in the weight, so no concat / reshape / relayout here.
    acc = jnp.dot(x_ref[0:ti, :], w_ref[0], preferred_element_type=jnp.float32)
    acc = acc + jnp.dot(x_ref[1:ti + 1, :], w_ref[1], preferred_element_type=jnp.float32)
    acc = acc + jnp.dot(x_ref[2:ti + 2, :], w_ref[2], preferred_element_type=jnp.float32)

    # Lane-dense bf16 store of the conv intermediate (stats below use the f32 acc,
    # so BatchNorm statistics are unaffected by the rounding).
    conv_ref[...] = acc.astype(conv_ref.dtype)

    # One-pass BN partials, written as a single lane-dense (2, L) store; the
    # per-channel reduction happens in the wrapper.
    stats_ref[...] = jnp.concatenate(
        [jnp.sum(acc, axis=0, keepdims=True),
         jnp.sum(acc * acc, axis=0, keepdims=True)],
        axis=0)


def _fold_weight_rows(w_hwio, W):
    """(3,3,Cin,Cout) conv weight -> (3, (W+2)*Cin, W*4*Cout) row-folded weight.

    Phase (a,b) of the x2-upsampled 3x3 conv: tap (kh,kw) reads the zero-padded
    ORIGINAL image at offset (dr,dc) = ((a+kh+1)//2, (b+kw+1)//2).
    """
    Cin, Cout = w_hwio.shape[2], w_hwio.shape[3]
    wf = jnp.zeros((3, 3, Cin, 2, 2, Cout), jnp.float32)   # (dr, dc, ci, a, b, co)
    for a in range(2):
        for b in range(2):
            for kh in range(3):
                for kw in range(3):
                    dr = (a + kh + 1) // 2
                    dc = (b + kw + 1) // 2
                    wf = wf.at[dr, dc, :, a, b, :].add(w_hwio[kh, kw])

    # Fold the column taps (dc) and the output column (w) into the matmul N axis so
    # that one matmul emits a whole lane-dense output row (w, a, b, co; co fastest).
    sel = np.zeros((W + 2, W, 3), np.float32)               # sel[x, w, d] = (x == w + d)
    for d in range(3):
        sel[np.arange(W) + d, np.arange(W), d] = 1.0
    wrow = jnp.einsum("xwd,rdcabo->rxcwabo", jnp.asarray(sel), wf)
    return wrow.reshape(3, (W + 2) * Cin, W * 4 * Cout)


def _pick_tile_rows(H, row_bytes, budget=2 << 20):
    """Largest divisor of H whose tile fits `budget`, preferring >= 2 row tiles so
    both v7x TensorCores (and the software pipeline) get work."""
    divisors = [d for d in range(1, H + 1) if H % d == 0]
    fits = [d for d in divisors if d * row_bytes <= budget] or [1]
    cands = [d for d in fits if H // d >= 2] or fits
    return max(cands)


@jax.jit
def upconv_forward(x_nchw, weight_oihw, gamma, beta, alpha):
    """UpConv forward: (N, Cin, H, W) -> (N, Cout, 2H, 2W)."""
    N, Cin, H, W = x_nchw.shape
    Cout = weight_oihw.shape[0]
    L = W * 4 * Cout                                # folded output lanes per original row

    # ---- tile / VMEM sizing (derived, generation-safe) ----
    row_bytes = L * 6 + (W + 2) * Cin * 2           # bf16 out + f32 acc + bf16 in, per row
    TI = _pick_tile_rows(H, row_bytes)
    T = H // TI
    w_bytes = 3 * (W + 2) * Cin * L * 2
    assert w_bytes <= (8 << 20), "row-folded conv weight too large for this specialization"
    est = 2 * ((TI + 2) * (W + 2) * Cin * 2 + TI * L * 2 + 2 * L * 4) + 2 * w_bytes + (1 << 20)
    vmem_limit = int(min(32 << 20, max(16 << 20, 2 * est)))   # <= 32 MiB: safe on v7x 64 MiB

    # ---- cheap original-resolution prep, all in bf16; the x2 upsample is never built ----
    x = jnp.transpose(x_nchw.astype(jnp.bfloat16), (0, 2, 3, 1))        # NCHW -> NHWC
    xpad = jnp.pad(x, ((0, 0), (1, 1), (1, 1), (0, 0)))                 # zero pad H/W by 1
    xflat = xpad.reshape(N, H + 2, (W + 2) * Cin)
    row_idx = jnp.arange(T)[:, None] * TI + jnp.arange(TI + 2)[None, :]
    x_tiles = xflat[:, row_idx, :]                                      # (N, T, TI+2, (W+2)*Cin)

    w_hwio = jnp.transpose(weight_oihw, (2, 3, 1, 0)).astype(jnp.float32)
    w_row = _fold_weight_rows(w_hwio, W).astype(jnp.bfloat16)           # (3, (W+2)*Cin, L)

    conv, stats = pl.pallas_call(
        _upconv_stats_kernel,
        grid=(N, T),
        in_specs=[
            pl.BlockSpec((None, None, TI + 2, (W + 2) * Cin), lambda n, t: (n, t, 0, 0)),
            pl.BlockSpec((3, (W + 2) * Cin, L), lambda n, t: (0, 0, 0)),
        ],
        out_specs=[
            pl.BlockSpec((None, None, TI, L), lambda n, t: (n, t, 0, 0)),
            pl.BlockSpec((None, None, 2, L), lambda n, t: (n, t, 0, 0)),
        ],
        out_shape=[
            jax.ShapeDtypeStruct((N, T, TI, L), jnp.bfloat16),   # bf16 conv intermediate
            jax.ShapeDtypeStruct((N, T, 2, L), jnp.float32),     # BN partials
        ],
        compiler_params=pltpu.CompilerParams(
            dimension_semantics=("parallel", "parallel"),
            vmem_limit_bytes=vmem_limit,
        ),
    )(x_tiles, w_row)

    # ---- global BatchNorm statistics (tiny cross-tile reduction in XLA) ----
    s = stats.reshape(N, T, 2, W, 2, 2, Cout).sum(axis=(0, 1, 3, 4, 5))   # (2, Cout)
    count = jnp.float32(N * H * W * 4)                                    # = N * (2H) * (2W)
    mean = s[0] / count
    # NOTE: one-pass E[x^2] - E[x]^2 in f32; adequate at these scales (switch to a
    # two-pass / Welford reduction if activation magnitudes become large).
    var = jnp.maximum(s[1] / count - mean * mean, 0.0)                    # biased batch var
    scale = gamma.astype(jnp.float32) * lax.rsqrt(var + 1e-5)
    shift = beta.astype(jnp.float32) - mean * scale
    alpha_f = jnp.asarray(alpha, jnp.float32)   # scalar (PReLU()) or (Cout,) both broadcast

    # ---- BN affine + PReLU, fused by XLA into the unavoidable phase-unfold transpose ----
    y = conv.astype(jnp.float32).reshape(N, H, W, 2, 2, Cout) * scale + shift
    y = jnp.where(y > 0, y, alpha_f * y)
    y = jnp.transpose(y, (0, 5, 1, 3, 2, 4))
    return y.reshape(N, Cout, 2 * H, 2 * W)

    # TODO(synk): BatchNorm running_mean/running_var updates (training-time buffer side
    # effect) and eval-mode normalization are not modeled; only the training-mode
    # forward activation path is reproduced.


if __name__ == "__main__":
    key = jax.random.PRNGKey(0)
    k1, k2, k3, k4 = jax.random.split(key, 4)

    # UpConv(in_channels=4, out_channels=8), input (2, 4, 16, 16).
    N, Cin, H, W = 2, 4, 16, 16
    Cout = 8

    x = jax.random.normal(k1, (N, Cin, H, W), jnp.float32)
    weight = 0.1 * jax.random.normal(k2, (Cout, Cin, 3, 3), jnp.float32)   # Conv2d (bias=False)
    gamma = 1.0 + 0.1 * jax.random.normal(k3, (Cout,), jnp.float32)        # BatchNorm2d.weight
    beta = 0.1 * jax.random.normal(k4, (Cout,), jnp.float32)               # BatchNorm2d.bias
    alpha = jnp.float32(0.25)                                              # PReLU default slope

    out = jax.block_until_ready(upconv_forward(x, weight, gamma, beta, alpha))
    assert out.shape == (N, Cout, 2 * H, 2 * W)

    # Pure-JAX reference (operands rounded to bf16 to match the kernel's MXU input
    # precision; accumulation is f32 on both sides).
    xb = x.astype(jnp.bfloat16).astype(jnp.float32)
    wb = weight.astype(jnp.bfloat16).astype(jnp.float32)
    xu = jnp.repeat(jnp.repeat(xb, 2, axis=2), 2, axis=3)
    xu_nhwc = jnp.transpose(xu, (0, 2, 3, 1))
    w_hwio_ref = jnp.transpose(wb, (2, 3, 1, 0))
    ref = lax.conv_general_dilated(
        xu_nhwc, w_hwio_ref, window_strides=(1, 1), padding=((1, 1), (1, 1)),
        dimension_numbers=("NHWC", "HWIO", "NHWC"))
    m = jnp.mean(ref, axis=(0, 1, 2), keepdims=True)
    v = jnp.mean((ref - m) ** 2, axis=(0, 1, 2), keepdims=True)
    refn = (ref - m) * lax.rsqrt(v + 1e-5) * gamma + beta
    refn = jnp.where(refn > 0, refn, alpha * refn)
    refn = jnp.transpose(refn, (0, 3, 1, 2))

    err = float(jnp.max(jnp.abs(out - refn)))
    # Tolerance covers bf16 rounding of the folded (summed) conv weights and of the
    # bf16-stored conv intermediate.
    assert err < 7.5e-2, f"mismatch vs reference: {err}"
    print("KERNEL_OK")
</pallas_src>

<mosaic_0001>
module attributes {stable_mosaic.version = 11 : i64} {
  func.func @_upconv_stats_kernel(%arg0: i32, %arg1: i32, %arg2: memref<1x1x10x72xbf16, #tpu.memory_space<vmem>>, %arg3: memref<3x72x512xbf16, #tpu.memory_space<vmem>>, %arg4: memref<1x1x8x512xbf16, #tpu.memory_space<vmem>>, %arg5: memref<1x1x2x512xf32, #tpu.memory_space<vmem>>) attributes {dimension_semantics = [#tpu.dimension_semantics<parallel>, #tpu.dimension_semantics<parallel>], iteration_bounds = array<i64: 2, 2>, scalar_prefetch = 0 : i64, scratch_operands = 0 : i64, tpu.core_type = #tpu.core_type<tc>, window_params = [{transform_indices = @transform_0, window_bounds = array<i64: 1, 1, 10, 72>}, {pipeline_mode = #tpu.pipeline_mode<synchronous>, transform_indices = @transform_1, window_bounds = array<i64: 3, 72, 512>}, {transform_indices = @transform_2, window_bounds = array<i64: 1, 1, 8, 512>}, {transform_indices = @transform_3, window_bounds = array<i64: 1, 1, 2, 512>}]} {
    %c0 = arith.constant 0 : index
    %c0_0 = arith.constant 0 : index
    %c0_1 = arith.constant 0 : index
    %c0_2 = arith.constant 0 : index
    %0 = vector.load %arg2[%c0, %c0_0, %c0_1, %c0_2] : memref<1x1x10x72xbf16, #tpu.memory_space<vmem>>, vector<1x1x8x72xbf16>
    %1 = vector.shape_cast %0 : vector<1x1x8x72xbf16> to vector<8x72xbf16>
    %c0_3 = arith.constant 0 : index
    %c0_4 = arith.constant 0 : index
    %c0_5 = arith.constant 0 : index
    %2 = vector.load %arg3[%c0_3, %c0_4, %c0_5] : memref<3x72x512xbf16, #tpu.memory_space<vmem>>, vector<1x72x512xbf16>
    %3 = vector.shape_cast %2 : vector<1x72x512xbf16> to vector<72x512xbf16>
    %cst = arith.constant dense<0.000000e+00> : vector<8x512xf32>
    %4 = tpu.matmul %1, %3, %cst {dimension_numbers = #tpu.dot_dimension_numbers<[1], [0], [0], [1], [0, 0, 1, 1], [], []>} : vector<8x72xbf16>, vector<72x512xbf16>, vector<8x512xf32> -> vector<8x512xf32>
    %c0_6 = arith.constant 0 : index
    %c0_7 = arith.constant 0 : index
    %c1 = arith.constant 1 : index
    %c0_8 = arith.constant 0 : index
    %5 = vector.load %arg2[%c0_6, %c0_7, %c1, %c0_8] : memref<1x1x10x72xbf16, #tpu.memory_space<vmem>>, vector<1x1x8x72xbf16>
    %6 = vector.shape_cast %5 : vector<1x1x8x72xbf16> to vector<8x72xbf16>
    %c1_9 = arith.constant 1 : index
    %c0_10 = arith.constant 0 : index
    %c0_11 = arith.constant 0 : index
    %7 = vector.load %arg3[%c1_9, %c0_10, %c0_11] : memref<3x72x512xbf16, #tpu.memory_space<vmem>>, vector<1x72x512xbf16>
    %8 = vector.shape_cast %7 : vector<1x72x512xbf16> to vector<72x512xbf16>
    %cst_12 = arith.constant dense<0.000000e+00> : vector<8x512xf32>
    %9 = tpu.matmul %6, %8, %cst_12 {dimension_numbers = #tpu.dot_dimension_numbers<[1], [0], [0], [1], [0, 0, 1, 1], [], []>} : vector<8x72xbf16>, vector<72x512xbf16>, vector<8x512xf32> -> vector<8x512xf32>
    %10 = arith.addf %4, %9 : vector<8x512xf32>
    %c0_13 = arith.constant 0 : index
    %c0_14 = arith.constant 0 : index
    %c2 = arith.constant 2 : index
    %c0_15 = arith.constant 0 : index
    %11 = vector.load %arg2[%c0_13, %c0_14, %c2, %c0_15] : memref<1x1x10x72xbf16, #tpu.memory_space<vmem>>, vector<1x1x8x72xbf16>
    %12 = vector.shape_cast %11 : vector<1x1x8x72xbf16> to vector<8x72xbf16>
    %c2_16 = arith.constant 2 : index
    %c0_17 = arith.constant 0 : index
    %c0_18 = arith.constant 0 : index
    %13 = vector.load %arg3[%c2_16, %c0_17, %c0_18] : memref<3x72x512xbf16, #tpu.memory_space<vmem>>, vector<1x72x512xbf16>
    %14 = vector.shape_cast %13 : vector<1x72x512xbf16> to vector<72x512xbf16>
    %cst_19 = arith.constant dense<0.000000e+00> : vector<8x512xf32>
    %15 = tpu.matmul %12, %14, %cst_19 {dimension_numbers = #tpu.dot_dimension_numbers<[1], [0], [0], [1], [0, 0, 1, 1], [], []>} : vector<8x72xbf16>, vector<72x512xbf16>, vector<8x512xf32> -> vector<8x512xf32>
    %16 = arith.addf %10, %15 : vector<8x512xf32>
    %17 = arith.truncf %16 : vector<8x512xf32> to vector<8x512xbf16>
    %c0_20 = arith.constant 0 : index
    %c0_21 = arith.constant 0 : index
    %c0_22 = arith.constant 0 : index
    %c0_23 = arith.constant 0 : index
    %18 = vector.load %arg4[%c0_20, %c0_21, %c0_22, %c0_23] : memref<1x1x8x512xbf16, #tpu.memory_space<vmem>>, vector<1x1x8x512xbf16>
    %19 = vector.shape_cast %18 : vector<1x1x8x512xbf16> to vector<8x512xbf16>
    %20 = vector.shape_cast %17 : vector<8x512xbf16> to vector<1x1x8x512xbf16>
    tpu.vector_store %arg4[%c0_20, %c0_21, %c0_22, %c0_23], %20 {strides = array<i32>} : memref<1x1x8x512xbf16, #tpu.memory_space<vmem>>, vector<1x1x8x512xbf16>,
    %cst_24 = arith.constant dense<0.000000e+00> : vector<512xf32>
    %21 = vector.multi_reduction <add>, %16, %cst_24 [0] : vector<8x512xf32> to vector<512xf32>
    %22 = vector.shape_cast %21 : vector<512xf32> to vector<1x512xf32>
    %23 = arith.mulf %16, %16 : vector<8x512xf32>
    %cst_25 = arith.constant dense<0.000000e+00> : vector<512xf32>
    %24 = vector.multi_reduction <add>, %23, %cst_25 [0] : vector<8x512xf32> to vector<512xf32>
    %25 = vector.shape_cast %24 : vector<512xf32> to vector<1x512xf32>
    %26 = tpu.concatenate %22, %25 in 0 : vector<1x512xf32>, vector<1x512xf32> -> vector<2x512xf32>
    %c0_26 = arith.constant 0 : index
    %c0_27 = arith.constant 0 : index
    %c0_28 = arith.constant 0 : index
    %c0_29 = arith.constant 0 : index
    %27 = vector.load %arg5[%c0_26, %c0_27, %c0_28, %c0_29] : memref<1x1x2x512xf32, #tpu.memory_space<vmem>>, vector<1x1x2x512xf32>
    %28 = vector.shape_cast %27 : vector<1x1x2x512xf32> to vector<2x512xf32>
    %29 = vector.shape_cast %26 : vector<2x512xf32> to vector<1x1x2x512xf32>
    tpu.vector_store %arg5[%c0_26, %c0_27, %c0_28, %c0_29], %29 {strides = array<i32>} : memref<1x1x2x512xf32, #tpu.memory_space<vmem>>, vector<1x1x2x512xf32>,
    return
  }
  func.func @transform_0(%arg0: i32, %arg1: i32) -> (i32, i32, i32, i32) {
    %c0_i32 = arith.constant 0 : i32
    %c0_i32_0 = arith.constant 0 : i32
    %c0_i32_1 = arith.constant 0 : i32
    return %arg0, %arg1, %c0_i32, %c0_i32_0 : i32, i32, i32, i32
  }
  func.func @transform_1(%arg0: i32, %arg1: i32) -> (i32, i32, i32) {
    %c0_i32 = arith.constant 0 : i32
    %c0_i32_0 = arith.constant 0 : i32
    %c0_i32_1 = arith.constant 0 : i32
    %c0_i32_2 = arith.constant 0 : i32
    return %c0_i32, %c0_i32_0, %c0_i32_1 : i32, i32, i32
  }
  func.func @transform_2(%arg0: i32, %arg1: i32) -> (i32, i32, i32, i32) {
    %c0_i32 = arith.constant 0 : i32
    %c0_i32_0 = arith.constant 0 : i32
    %c0_i32_1 = arith.constant 0 : i32
    return %arg0, %arg1, %c0_i32, %c0_i32_0 : i32, i32, i32, i32
  }
  func.func @transform_3(%arg0: i32, %arg1: i32) -> (i32, i32, i32, i32) {
    %c0_i32 = arith.constant 0 : i32
    %c0_i32_0 = arith.constant 0 : i32
    %c0_i32_1 = arith.constant 0 : i32
    return %arg0, %arg1, %c0_i32, %c0_i32_0 : i32, i32, i32, i32
  }
}

</mosaic_0001>

<llo_original>
// kernel: upconv_forward.1
$region0: #{upconv_forward.1}
  #allocation0 [shape = 'u32[]', space=smem, size = 0x4, offset = 0x4, fixed_abs, tag = 'smem constant byte address 0x4 - core index']
  #allocation1 [shape = 'u32[72,128]{1,0:T(1,128)}', space=vmem, size = 0x9000, scoped, tag = 'internal scratch']
  %s0 = inlined_call_operand.vmem [shape: bf16[2,2,10,72], index: 0, kind: input, shape index: {}]
  %s1 = inlined_call_operand.vmem [shape: bf16[3,72,512], index: 1, kind: input, shape index: {}]
  %s2 = inlined_call_operand.vmem [shape: bf16[2,2,8,512], index: 2, kind: output, shape index: {0}]
  %s3 = inlined_call_operand.vmem [shape: f32[2,2,2,512], index: 3, kind: output, shape index: {1}]
  %4 = xla_tuple %s2, %s3
  %s5 = sld [smem:[#allocation0]]
  $region49: #{upconv_forward.1} parent=0
    _
  %s7 = ssub.s32 1, %s5
  %s8 = scalar_select 0, %s7, %s5
  loop: start=0, step=1, limit=6
  $region2: #{upconv_forward.1} parent=0 // loop_pre_header
    _
  $region3: #{upconv_forward.1} parent=0 // loop_header
    %s10 = sphi 0, %s14
    %p11 = scmp.ge.s32.totalorder %s10, 6
    %s17 = sphi 0, %s29
    %s18 = sphi 0, %s25
    %s19 = sphi 0, %s17
    %s20 = sphi 0, %s18
    %s21 = sphi 0, %s19
    %s22 = sphi 0, %s20
    %s34 = sphi 0, %s36
    %s37 = sphi 0, %s34
    %s38 = sphi 0, %s37
    %s54 = sphi 0, %s38
    %s58 = sphi 0, %s58
    %s60 = sphi 0, %s58
    %s61 = sphi 0, %s60
    %s75 = sphi 0, %s61
    %s83 = sphi 0, %s85
    %s86 = sphi 0, %s83
    %s87 = sphi 0, %s86
    %s103 = sphi 0, %s87
    %s111 = sphi 0, %s113
    %s114 = sphi 0, %s111
    %s115 = sphi 0, %s114
    %s131 = sphi 0, %s115
  $region4: #{upconv_forward.1} parent=0 // loop_header_branch
    %13 = sbr.rel (%p11) target = $region8
  $region5: #{upconv_forward.1} parent=0 // loop_body
    %s15 = ssub.s32 %s10, 1
    %s16 = ssub.s32 %s10, 2
    %s23 = sadd.s32 1, %s18
    %p24 = scmp.ge.s32.totalorder %s23, 2
    %s25 = scalar_select %p24, 0, %s23
    %s26 = sadd.s32 1, %s17
    %s27 = scalar_select %p24, %s26, %s17
    %p28 = scmp.ge.s32.totalorder %s27, 2
    %s29 = scalar_select %p28, 0, %s27
    %s30 = ssub.s32 %s17, %s29
    %s31 = ssub.s32 %s18, %s25
    %s32 = sor.u32 %s30, %s31
    %p33 = scmp.eq.s32.totalorder %s32, 0
    %s35 = sadd.s32 %s34, 1
    %s36 = scalar_select %p33, %s34, %s35
    %p39 = pneg %p33
    %p40 = scmp.eq.s32.totalorder %s10, 3
    %p41 = por %p39, %p40
    %p42 = scmp.ne.s32.totalorder %s34, %s37
    %p43 = scmp.eq.s32.totalorder %s10, 0
    %p44 = por %p42, %p43
    %p45 = scmp.ne.s32.totalorder %s34, %s37
    %p46 = scmp.eq.s32.totalorder %s15, 3
    %p47 = por %p45, %p46
    %p48 = scmp.ne.s32.totalorder %s37, %s38
    %p49 = scmp.eq.s32.totalorder %s15, 0
    %p50 = por %p48, %p49
    %p51 = scmp.ne.s32.totalorder %s37, %s38
    %p52 = scmp.eq.s32.totalorder %s16, 3
    %p53 = por %p51, %p52
    %p55 = scmp.ne.s32.totalorder %s38, %s54
    %p56 = scmp.eq.s32.totalorder %s16, 0
    %p57 = por %p55, %p56
    %s59 = sadd.s32 %s58, 1
    %p62 = scmp.eq.s32.totalorder %s10, 3
    %p63 = scmp.ne.s32.totalorder %s58, %s60
    %p64 = scmp.eq.s32.totalorder %s10, 0
    %p65 = por %p63, %p64
    %p66 = scmp.ne.s32.totalorder %s58, %s60
    %p67 = scmp.eq.s32.totalorder %s15, 3
    %p68 = por %p66, %p67
    %p69 = scmp.ne.s32.totalorder %s60, %s61
    %p70 = scmp.eq.s32.totalorder %s15, 0
    %p71 = por %p69, %p70
    %p72 = scmp.ne.s32.totalorder %s60, %s61
    %p73 = scmp.eq.s32.totalorder %s16, 3
    %p74 = por %p72, %p73
    %p76 = scmp.ne.s32.totalorder %s61, %s75
    %p77 = scmp.eq.s32.totalorder %s16, 0
    %p78 = por %p76, %p77
    %s79 = ssub.s32 %s17, %s29
    %s80 = ssub.s32 %s18, %s25
    %s81 = sor.u32 %s79, %s80
    %p82 = scmp.eq.s32.totalorder %s81, 0
    %s84 = sadd.s32 %s83, 1
    %s85 = scalar_select %p82, %s83, %s84
    %p88 = pneg %p82
    %p89 = scmp.eq.s32.totalorder %s10, 3
    %p90 = por %p88, %p89
    %p91 = scmp.ne.s32.totalorder %s83, %s86
    %p92 = scmp.eq.s32.totalorder %s10, 0
    %p93 = por %p91, %p92
    %p94 = scmp.ne.s32.totalorder %s83, %s86
    %p95 = scmp.eq.s32.totalorder %s15, 3
    %p96 = por %p94, %p95
    %p97 = scmp.ne.s32.totalorder %s86, %s87
    %p98 = scmp.eq.s32.totalorder %s15, 0
    %p99 = por %p97, %p98
    %p100 = scmp.ne.s32.totalorder %s86, %s87
    %p101 = scmp.eq.s32.totalorder %s16, 3
    %p102 = por %p100, %p101
    %p104 = scmp.ne.s32.totalorder %s87, %s103
    %p105 = scmp.eq.s32.totalorder %s16, 0
    %p106 = por %p104, %p105
    %s107 = ssub.s32 %s17, %s29
    %s108 = ssub.s32 %s18, %s25
    %s109 = sor.u32 %s107, %s108
    %p110 = scmp.eq.s32.totalorder %s109, 0
    %s112 = sadd.s32 %s111, 1
    %s113 = scalar_select %p110, %s111, %s112
    %p116 = pneg %p110
    %p117 = scmp.eq.s32.totalorder %s10, 3
    %p118 = por %p116, %p117
    %p119 = scmp.ne.s32.totalorder %s111, %s114
    %p120 = scmp.eq.s32.totalorder %s10, 0
    %p121 = por %p119, %p120
    %p122 = scmp.ne.s32.totalorder %s111, %s114
    %p123 = scmp.eq.s32.totalorder %s15, 3
    %p124 = por %p122, %p123
    %p125 = scmp.ne.s32.totalorder %s114, %s115
    %p126 = scmp.eq.s32.totalorder %s15, 0
    %p127 = por %p125, %p126
    %p128 = scmp.ne.s32.totalorder %s114, %s115
    %p129 = scmp.eq.s32.totalorder %s16, 3
    %p130 = por %p128, %p129
    %p132 = scmp.ne.s32.totalorder %s115, %s131
    %p133 = scmp.eq.s32.totalorder %s16, 0
    %p134 = por %p132, %p133
    %p135 = scmp.le.s32.totalorder 1, %s10
    %p136 = scmp.lt.s32.totalorder %s10, 5
    %p137 = pnand %p135, %p136
    %p138 = pneg %p137
    // Predicated region
    $region9: #{upconv_forward.1} parent=5 // pred_check
      _
    $region10: #{upconv_forward.1} parent=5 // pred_check_branch
      %140 = sbr.rel (%p137) target = $region12
    $region11: #{upconv_forward.1} parent=5 // pred_region
      %s141 = ssub.s32 %s10, 1
      // Predicated region
      $region13: #{upconv_forward.1} parent=11 // pred_check
        %p142 = pneg %p71
      $region14: #{upconv_forward.1} parent=11 // pred_check_branch
        %144 = sbr.rel (%p142) target = $region16
      $region15: #{upconv_forward.1} parent=11 // pred_region
        _
      $region16: #{upconv_forward.1} parent=11 // pred_fallthru
        _
    $region12: #{upconv_forward.1} parent=5 // pred_fallthru
      _
    %p145 = scmp.lt.s32.totalorder %s10, 4
    // Predicated region
    $region17: #{upconv_forward.1} parent=5 // pred_check
      %p146 = pneg %p145
    $region18: #{upconv_forward.1} parent=5 // pred_check_branch
      %148 = sbr.rel (%p146) target = $region20
    $region19: #{upconv_forward.1} parent=5 // pred_region
      // Predicated region
      $region21: #{upconv_forward.1} parent=19 // pred_check
        %p149 = pneg %p44
      $region22: #{upconv_forward.1} parent=19 // pred_check_branch
        %151 = sbr.rel (%p149) target = $region24
      $region23: #{upconv_forward.1} parent=19 // pred_region
        %p152 = scmp.lt.s32.totalorder %s17, 1
        %s153 = scalar_select %p152, %s17, 1
        %p154 = scmp.lt.s32.totalorder %s18, 1
        %s155 = scalar_select %p154, %s18, 1
        %s156 = smul.addr %s155, 2
        %s157 = smul.addr %s153, 4
        %s158 = sadd.s32 %s156, %s157
        %s159 = smul.addr %s158, 4
        %s160 = scalar_lea.vmem %s0, %s159
      $region24: #{upconv_forward.1} parent=19 // pred_fallthru
        _
    $region20: #{upconv_forward.1} parent=5 // pred_fallthru
      _
    %p161 = scmp.le.s32.totalorder 1, %s10
    %p162 = scmp.lt.s32.totalorder %s10, 5
    %p163 = pnand %p161, %p162
    %p164 = pneg %p163
    // Predicated region
    $region25: #{upconv_forward.1} parent=5 // pred_check
      _
    $region26: #{upconv_forward.1} parent=5 // pred_check_branch
      %166 = sbr.rel (%p163) target = $region28
    $region27: #{upconv_forward.1} parent=5 // pred_region
      %s167 = ssub.s32 %s10, 1
      %p168 = scmp.lt.s32.totalorder %s19, 1
      %s169 = scalar_select %p168, %s19, 1
      %p170 = scmp.lt.s32.totalorder %s20, 1
      %s171 = scalar_select %p170, %s20, 1
      %s172 = smul.addr %s171, 2
      %s173 = smul.addr %s169, 4
      %s174 = sadd.s32 %s172, %s173
      %s175 = smul.addr %s174, 4
      %s176 = scalar_lea.vmem %s0, %s175
      %p177 = pneg %p50
      %p178 = pneg %p47
      %p179 = pneg %p71
      %p180 = pneg %p68
      %p181 = pneg %p99
      %p182 = pneg %p96
      %p183 = scmp.lt.s32.totalorder %s19, 1
      %s184 = scalar_select %p183, %s19, 1
      %p185 = scmp.lt.s32.totalorder %s20, 1
      %s186 = scalar_select %p185, %s20, 1
      %s187 = smul.addr %s186, 4
      %s188 = smul.addr %s184, 8
      %s189 = sadd.s32 %s187, %s188
      %s190 = smul.addr %s189, 4
      %s191 = scalar_lea.vmem %s2, %s190
      %p192 = pneg %p127
      %p193 = pneg %p124
      %p194 = scmp.lt.s32.totalorder %s19, 1
      %s195 = scalar_select %p194, %s19, 1
      %p196 = scmp.lt.s32.totalorder %s20, 1
      %s197 = scalar_select %p196, %s20, 1
      %s198 = smul.addr %s197, 4
      %s199 = smul.addr %s195, 8
      %s200 = sadd.s32 %s198, %s199
      %s201 = smul.addr %s200, 2
      %s202 = scalar_lea.vmem %s3, %s201
      %p203 = scmp.lt.s32.totalorder %s19, 1
      %s204 = scalar_select %p203, %s19, 1
      %p205 = scmp.lt.s32.totalorder %s20, 1
      %s206 = scalar_select %p205, %s20, 1
      %s207 = smul.addr %s206, 2
      %s208 = smul.addr %s204, 4
      %s209 = sadd.s32 %s207, %s208
      %s210 = smul.addr %s209, 4
      %s211 = scalar_lea.vmem %s0, %s210
      %p212 = scmp.lt.s32.totalorder %s19, 1
      %s213 = scalar_select %p212, %s19, 1
      %p214 = scmp.lt.s32.totalorder %s20, 1
      %s215 = scalar_select %p214, %s20, 1
      %s216 = smul.addr %s215, 4
      %s217 = smul.addr %s213, 8
      %s218 = sadd.s32 %s216, %s217
      %s219 = smul.addr %s218, 4
      %s220 = scalar_lea.vmem %s2, %s219
      %p221 = scmp.lt.s32.totalorder %s19, 1
      %s222 = scalar_select %p221, %s19, 1
      %p223 = scmp.lt.s32.totalorder %s20, 1
      %s224 = scalar_select %p223, %s20, 1
      %s225 = smul.addr %s224, 4
      %s226 = smul.addr %s222, 8
      %s227 = sadd.s32 %s225, %s226
      %s228 = smul.addr %s227, 2
      %s229 = scalar_lea.vmem %s3, %s228
      %v231 = vld [vmem:[%s211] sm:$0xf]
      %v232 = vld [vmem:[%s1] sm:$0xff]
      %v233 = vld [vmem:[%s1 + $0x8] sm:$0xff]
      %v234 = vld [vmem:[%s1 + $0x10] sm:$0xff]
      %v235 = vld [vmem:[%s1 + $0x18] sm:$0xff]
      %v236 = vld [vmem:[%s1 + $0x20] sm:$0xff]
      %v237 = vld [vmem:[%s1 + $0x28] sm:$0xff]
      %v238 = vld [vmem:[%s1 + $0x30] sm:$0xff]
      %v239 = vld [vmem:[%s1 + $0x38] sm:$0xff]
      %v240 = vld [vmem:[%s1 + $0x40] sm:$0xff]
      %v241 = vld [vmem:[%s1 + $0x48] sm:$0xff]
      %v242 = vld [vmem:[%s1 + $0x50] sm:$0xff]
      %v243 = vld [vmem:[%s1 + $0x58] sm:$0xff]
      %v244 = vld [vmem:[%s1 + $0x60] sm:$0xff]
      %v245 = vld [vmem:[%s1 + $0x68] sm:$0xff]
      %v246 = vld [vmem:[%s1 + $0x70] sm:$0xff]
      %v247 = vld [vmem:[%s1 + $0x78] sm:$0xff]
      %v248 = vld [vmem:[%s1 + $0x80] sm:$0xff]
      %v249 = vld [vmem:[%s1 + $0x88] sm:$0xff]
      %v250 = vld [vmem:[%s211 + $0x4] sm:$0x1]
      %s251 = scalar_lea.vmem %s1, 144
      %v252 = vld [vmem:[%s251] sm:$0xff]
      %v253 = vld [vmem:[%s251 + $0x8] sm:$0xff]
      %v254 = vld [vmem:[%s251 + $0x10] sm:$0xff]
      %v255 = vld [vmem:[%s251 + $0x18] sm:$0xff]
      %v256 = vld [vmem:[%s251 + $0x20] sm:$0xff]
      %v257 = vld [vmem:[%s251 + $0x28] sm:$0xff]
      %v258 = vld [vmem:[%s251 + $0x30] sm:$0xff]
      %v259 = vld [vmem:[%s251 + $0x38] sm:$0xff]
      %v260 = vld [vmem:[%s251 + $0x40] sm:$0xff]
      %v261 = vld [vmem:[%s251 + $0x48] sm:$0xff]
      %v262 = vld [vmem:[%s251 + $0x50] sm:$0xff]
      %v263 = vld [vmem:[%s251 + $0x58] sm:$0xff]
      %v264 = vld [vmem:[%s251 + $0x60] sm:$0xff]
      %v265 = vld [vmem:[%s251 + $0x68] sm:$0xff]
      %v266 = vld [vmem:[%s251 + $0x70] sm:$0xff]
      %v267 = vld [vmem:[%s251 + $0x78] sm:$0xff]
      %v268 = vld [vmem:[%s251 + $0x80] sm:$0xff]
      %v269 = vld [vmem:[%s251 + $0x88] sm:$0xff]
      %v272 = vunpack.c.l.b16 %v231
      %v273 = vunpack.c.l.b16 %v250
      %v274 = vpack.c.b16 %v273, %v272
      %v276 = vshrl.u32 %v274, 16
      %v278 = vshll.u32 %v274, 16
      %v280 = vrot.slane %v278, 1
      %v281 = vor.u32 %v276, %v280
      %v300 = vunpack.c.l.b16 %v252
      %v301 = vunpack.c.h.b16 %v252
      %v302 = vunpack.c.l.b16 %v253
      %v303 = vunpack.c.h.b16 %v253
      %v304 = vunpack.c.l.b16 %v254
      %v305 = vunpack.c.h.b16 %v254
      %v306 = vunpack.c.l.b16 %v255
      %v307 = vunpack.c.h.b16 %v255
      %v308 = vunpack.c.l.b16 %v256
      %v309 = vunpack.c.h.b16 %v256
      %v310 = vunpack.c.l.b16 %v257
      %v311 = vunpack.c.h.b16 %v257
      %v312 = vunpack.c.l.b16 %v258
      %v313 = vunpack.c.h.b16 %v258
      %v314 = vunpack.c.l.b16 %v259
      %v315 = vunpack.c.h.b16 %v259
      %v316 = vunpack.c.l.b16 %v260
      %v317 = vunpack.c.h.b16 %v260
      %v318 = vunpack.c.l.b16 %v261
      %v319 = vunpack.c.h.b16 %v261
      %v320 = vunpack.c.l.b16 %v262
      %v321 = vunpack.c.h.b16 %v262
      %v322 = vunpack.c.l.b16 %v263
      %v323 = vunpack.c.h.b16 %v263
      %v324 = vunpack.c.l.b16 %v264
      %v325 = vunpack.c.h.b16 %v264
      %v326 = vunpack.c.l.b16 %v265
      %v327 = vunpack.c.h.b16 %v265
      %v328 = vunpack.c.l.b16 %v266
      %v329 = vunpack.c.h.b16 %v266
      %v330 = vunpack.c.l.b16 %v267
      %v331 = vunpack.c.h.b16 %v267
      %v332 = vunpack.c.l.b16 %v268
      %v333 = vunpack.c.h.b16 %v268
      %v334 = vunpack.c.l.b16 %v269
      %v335 = vunpack.c.h.b16 %v269
      %v336 = vpack.c.b16 %v304, %v300
      %v337 = vpack.c.b16 %v305, %v301
      %v338 = vpack.c.b16 %v306, %v302
      %v339 = vpack.c.b16 %v307, %v303
      %v340 = vpack.c.b16 %v312, %v308
      %v341 = vpack.c.b16 %v313, %v309
      %v342 = vpack.c.b16 %v314, %v310
      %v343 = vpack.c.b16 %v315, %v311
      %v344 = vpack.c.b16 %v320, %v316
      %v345 = vpack.c.b16 %v321, %v317
      %v346 = vpack.c.b16 %v322, %v318
      %v347 = vpack.c.b16 %v323, %v319
      %v348 = vpack.c.b16 %v328, %v324
      %v349 = vpack.c.b16 %v329, %v325
      %v350 = vpack.c.b16 %v330, %v326
      %v351 = vpack.c.b16 %v331, %v327
      %v352 = vpack.c.b16 %v332, %v332
      %v353 = vpack.c.b16 %v333, %v333
      %v354 = vpack.c.b16 %v334, %v334
      %v355 = vpack.c.b16 %v335, %v335
      %vm372 = vcmask 588800
      %v374 = vsel %vm372, %v281, 0
      %vm376 = vcmask 1043456
      %v378 = vsel %vm376, %v352, 0
      %v381 = vsel %vm376, %v353, 0
      %v384 = vsel %vm376, %v354, 0
      %v387 = vsel %vm376, %v355, 0
      %389 = vmatpush.bf16.msra.mxu0 0
      %390 = vmatpush.bf16.msra.mxu0 0
      %391 = vmatpush.bf16.msra.mxu0 0
      %392 = vmatpush.bf16.msra.mxu0 %v378
      %393 = vmatpush.bf16.msra.mxu0 %v348
      %394 = vmatpush.bf16.msra.mxu0 %v344
      %395 = vmatpush.bf16.msra.mxu0 %v340
      %396 = vmatpush.bf16.msra.mxu0 %v336
      %397 = vmatmul.bf16.gmra.mxu0 %v374
      %v398 = vpop.f32.mrf.mxu0
      %v399 = vadd.f32 0.0, %v398
      %v400 = vpop.f32.mrf.mxu0
      %401 = vdwg.mxu0
      %402 = vmatpush.bf16.msra.mxu0 0
      %403 = vmatpush.bf16.msra.mxu0 0
      %404 = vmatpush.bf16.msra.mxu0 0
      %405 = vmatpush.bf16.msra.mxu0 %v381
      %406 = vmatpush.bf16.msra.mxu0 %v349
      %407 = vmatpush.bf16.msra.mxu0 %v345
      %408 = vmatpush.bf16.msra.mxu0 %v341
      %409 = vmatpush.bf16.msra.mxu0 %v337
      %410 = vmatmul.bf16.gmra.mxu0 %v374
      %v411 = vpop.f32.mrf.mxu0
      %v412 = vadd.f32 0.0, %v411
      %v413 = vpop.f32.mrf.mxu0
      %414 = vdwg.mxu0
      %415 = vmatpush.bf16.msra.mxu0 0
      %416 = vmatpush.bf16.msra.mxu0 0
      %417 = vmatpush.bf16.msra.mxu0 0
      %418 = vmatpush.bf16.msra.mxu0 %v384
      %419 = vmatpush.bf16.msra.mxu0 %v350
      %420 = vmatpush.bf16.msra.mxu0 %v346
      %421 = vmatpush.bf16.msra.mxu0 %v342
      %422 = vmatpush.bf16.msra.mxu0 %v338
      %423 = vmatmul.bf16.gmra.mxu0 %v374
      %v424 = vpop.f32.mrf.mxu0
      %v425 = vadd.f32 0.0, %v424
      %v426 = vpop.f32.mrf.mxu0
      %427 = vdwg.mxu0
      %428 = vmatpush.bf16.msra.mxu0 0
      %429 = vmatpush.bf16.msra.mxu0 0
      %430 = vmatpush.bf16.msra.mxu0 0
      %431 = vmatpush.bf16.msra.mxu0 %v387
      %432 = vmatpush.bf16.msra.mxu0 %v351
      %433 = vmatpush.bf16.msra.mxu0 %v347
      %434 = vmatpush.bf16.msra.mxu0 %v343
      %435 = vmatpush.bf16.msra.mxu0 %v339
      %436 = vmatmul.bf16.gmra.mxu0 %v374
      %v437 = vpop.f32.mrf.mxu0
      %v438 = vadd.f32 0.0, %v437
      %v439 = vpop.f32.mrf.mxu0
      %440 = vdwg.mxu0
      %v459 = vunpack.c.l.b16 %v232
      %v460 = vunpack.c.h.b16 %v232
      %v461 = vunpack.c.l.b16 %v233
      %v462 = vunpack.c.h.b16 %v233
      %v463 = vunpack.c.l.b16 %v234
      %v464 = vunpack.c.h.b16 %v234
      %v465 = vunpack.c.l.b16 %v235
      %v466 = vunpack.c.h.b16 %v235
      %v467 = vunpack.c.l.b16 %v236
      %v468 = vunpack.c.h.b16 %v236
      %v469 = vunpack.c.l.b16 %v237
      %v470 = vunpack.c.h.b16 %v237
      %v471 = vunpack.c.l.b16 %v238
      %v472 = vunpack.c.h.b16 %v238
      %v473 = vunpack.c.l.b16 %v239
      %v474 = vunpack.c.h.b16 %v239
      %v475 = vunpack.c.l.b16 %v240
      %v476 = vunpack.c.h.b16 %v240
      %v477 = vunpack.c.l.b16 %v241
      %v478 = vunpack.c.h.b16 %v241
      %v479 = vunpack.c.l.b16 %v242
      %v480 = vunpack.c.h.b16 %v242
      %v481 = vunpack.c.l.b16 %v243
      %v482 = vunpack.c.h.b16 %v243
      %v483 = vunpack.c.l.b16 %v244
      %v484 = vunpack.c.h.b16 %v244
      %v485 = vunpack.c.l.b16 %v245
      %v486 = vunpack.c.h.b16 %v245
      %v487 = vunpack.c.l.b16 %v246
      %v488 = vunpack.c.h.b16 %v246
      %v489 = vunpack.c.l.b16 %v247
      %v490 = vunpack.c.h.b16 %v247
      %v491 = vunpack.c.l.b16 %v248
      %v492 = vunpack.c.h.b16 %v248
      %v493 = vunpack.c.l.b16 %v249
      %v494 = vunpack.c.h.b16 %v249
      %v495 = vpack.c.b16 %v463, %v459
      %v496 = vpack.c.b16 %v464, %v460
      %v497 = vpack.c.b16 %v465, %v461
      %v498 = vpack.c.b16 %v466, %v462
      %v499 = vpack.c.b16 %v471, %v467
      %v500 = vpack.c.b16 %v472, %v468
      %v501 = vpack.c.b16 %v473, %v469
      %v502 = vpack.c.b16 %v474, %v470
      %v503 = vpack.c.b16 %v479, %v475
      %v504 = vpack.c.b16 %v480, %v476
      %v505 = vpack.c.b16 %v481, %v477
      %v506 = vpack.c.b16 %v482, %v478
      %v507 = vpack.c.b16 %v487, %v483
      %v508 = vpack.c.b16 %v488, %v484
      %v509 = vpack.c.b16 %v489, %v485
      %v510 = vpack.c.b16 %v490, %v486
      %v511 = vpack.c.b16 %v491, %v491
      %v512 = vpack.c.b16 %v492, %v492
      %v513 = vpack.c.b16 %v493, %v493
      %v514 = vpack.c.b16 %v494, %v494
      %v532 = vsel %vm372, %v231, 0
      %v535 = vsel %vm376, %v511, 0
      %v538 = vsel %vm376, %v512, 0
      %v541 = vsel %vm376, %v513, 0
      %v544 = vsel %vm376, %v514, 0
      %546 = vmatpush.bf16.msra.mxu0 0
      %547 = vmatpush.bf16.msra.mxu0 0
      %548 = vmatpush.bf16.msra.mxu0 0
      %549 = vmatpush.bf16.msra.mxu0 %v535
      %550 = vmatpush.bf16.msra.mxu0 %v507
      %551 = vmatpush.bf16.msra.mxu0 %v503
      %552 = vmatpush.bf16.msra.mxu0 %v499
      %553 = vmatpush.bf16.msra.mxu0 %v495
      %554 = vmatmul.bf16.gmra.mxu0 %v532
      %v555 = vpop.f32.mrf.mxu0
      %v556 = vadd.f32 %v399, %v555
      %v557 = vpop.f32.mrf.mxu0
      %558 = vdwg.mxu0
      %559 = vmatpush.bf16.msra.mxu0 0
      %560 = vmatpush.bf16.msra.mxu0 0
      %561 = vmatpush.bf16.msra.mxu0 0
      %562 = vmatpush.bf16.msra.mxu0 %v538
      %563 = vmatpush.bf16.msra.mxu0 %v508
      %564 = vmatpush.bf16.msra.mxu0 %v504
      %565 = vmatpush.bf16.msra.mxu0 %v500
      %566 = vmatpush.bf16.msra.mxu0 %v496
      %567 = vmatmul.bf16.gmra.mxu0 %v532
      %v568 = vpop.f32.mrf.mxu0
      %v569 = vadd.f32 %v412, %v568
      %v570 = vpop.f32.mrf.mxu0
      %571 = vdwg.mxu0
      %572 = vmatpush.bf16.msra.mxu0 0
      %573 = vmatpush.bf16.msra.mxu0 0
      %574 = vmatpush.bf16.msra.mxu0 0
      %575 = vmatpush.bf16.msra.mxu0 %v541
      %576 = vmatpush.bf16.msra.mxu0 %v509
      %577 = vmatpush.bf16.msra.mxu0 %v505
      %578 = vmatpush.bf16.msra.mxu0 %v501
      %579 = vmatpush.bf16.msra.mxu0 %v497
      %580 = vmatmul.bf16.gmra.mxu0 %v532
      %v581 = vpop.f32.mrf.mxu0
      %v582 = vadd.f32 %v425, %v581
      %v583 = vpop.f32.mrf.mxu0
      %584 = vdwg.mxu0
      %585 = vmatpush.bf16.msra.mxu0 0
      %586 = vmatpush.bf16.msra.mxu0 0
      %587 = vmatpush.bf16.msra.mxu0 0
      %588 = vmatpush.bf16.msra.mxu0 %v544
      %589 = vmatpush.bf16.msra.mxu0 %v510
      %590 = vmatpush.bf16.msra.mxu0 %v506
      %591 = vmatpush.bf16.msra.mxu0 %v502
      %592 = vmatpush.bf16.msra.mxu0 %v498
      %593 = vmatmul.bf16.gmra.mxu0 %v532
      %v594 = vpop.f32.mrf.mxu0
      %v595 = vadd.f32 %v438, %v594
      %v596 = vpop.f32.mrf.mxu0
      %597 = vdwg.mxu0
      %v598 = vld [vmem:[%s211] sm:$0xe]
      %s599 = scalar_lea.vmem %s1, 288
      %v600 = vld [vmem:[%s599] sm:$0xff]
      %v601 = vld [vmem:[%s599 + $0x8] sm:$0xff]
      %v602 = vld [vmem:[%s599 + $0x10] sm:$0xff]
      %v603 = vld [vmem:[%s599 + $0x18] sm:$0xff]
      %v604 = vld [vmem:[%s599 + $0x20] sm:$0xff]
      %v605 = vld [vmem:[%s599 + $0x28] sm:$0xff]
      %v606 = vld [vmem:[%s599 + $0x30] sm:$0xff]
      %v607 = vld [vmem:[%s599 + $0x38] sm:$0xff]
      %v608 = vld [vmem:[%s599 + $0x40] sm:$0xff]
      %v609 = vld [vmem:[%s599 + $0x48] sm:$0xff]
      %v610 = vld [vmem:[%s599 + $0x50] sm:$0xff]
      %v611 = vld [vmem:[%s599 + $0x58] sm:$0xff]
      %v612 = vld [vmem:[%s599 + $0x60] sm:$0xff]
      %v613 = vld [vmem:[%s599 + $0x68] sm:$0xff]
      %v614 = vld [vmem:[%s599 + $0x70] sm:$0xff]
      %v615 = vld [vmem:[%s599 + $0x78] sm:$0xff]
      %v616 = vld [vmem:[%s599 + $0x80] sm:$0xff]
      %v617 = vld [vmem:[%s599 + $0x88] sm:$0xff]
      %v619 = vunpack.c.l.b16 %v598
      %v620 = vpack.c.b16 %v273, %v619
      %v621 = vrot.slane %v620, 1
      %v640 = vunpack.c.l.b16 %v600
      %v641 = vunpack.c.h.b16 %v600
      %v642 = vunpack.c.l.b16 %v601
      %v643 = vunpack.c.h.b16 %v601
      %v644 = vunpack.c.l.b16 %v602
      %v645 = vunpack.c.h.b16 %v602
      %v646 = vunpack.c.l.b16 %v603
      %v647 = vunpack.c.h.b16 %v603
      %v648 = vunpack.c.l.b16 %v604
      %v649 = vunpack.c.h.b16 %v604
      %v650 = vunpack.c.l.b16 %v605
      %v651 = vunpack.c.h.b16 %v605
      %v652 = vunpack.c.l.b16 %v606
      %v653 = vunpack.c.h.b16 %v606
      %v654 = vunpack.c.l.b16 %v607
      %v655 = vunpack.c.h.b16 %v607
      %v656 = vunpack.c.l.b16 %v608
      %v657 = vunpack.c.h.b16 %v608
      %v658 = vunpack.c.l.b16 %v609
      %v659 = vunpack.c.h.b16 %v609
      %v660 = vunpack.c.l.b16 %v610
      %v661 = vunpack.c.h.b16 %v610
      %v662 = vunpack.c.l.b16 %v611
      %v663 = vunpack.c.h.b16 %v611
      %v664 = vunpack.c.l.b16 %v612
      %v665 = vunpack.c.h.b16 %v612
      %v666 = vunpack.c.l.b16 %v613
      %v667 = vunpack.c.h.b16 %v613
      %v668 = vunpack.c.l.b16 %v614
      %v669 = vunpack.c.h.b16 %v614
      %v670 = vunpack.c.l.b16 %v615
      %v671 = vunpack.c.h.b16 %v615
      %v672 = vunpack.c.l.b16 %v616
      %v673 = vunpack.c.h.b16 %v616
      %v674 = vunpack.c.l.b16 %v617
      %v675 = vunpack.c.h.b16 %v617
      %v676 = vpack.c.b16 %v644, %v640
      %v677 = vpack.c.b16 %v645, %v641
      %v678 = vpack.c.b16 %v646, %v642
      %v679 = vpack.c.b16 %v647, %v643
      %v680 = vpack.c.b16 %v652, %v648
      %v681 = vpack.c.b16 %v653, %v649
      %v682 = vpack.c.b16 %v654, %v650
      %v683 = vpack.c.b16 %v655, %v651
      %v684 = vpack.c.b16 %v660, %v656
      %v685 = vpack.c.b16 %v661, %v657
      %v686 = vpack.c.b16 %v662, %v658
      %v687 = vpack.c.b16 %v663, %v659
      %v688 = vpack.c.b16 %v668, %v664
      %v689 = vpack.c.b16 %v669, %v665
      %v690 = vpack.c.b16 %v670, %v666
      %v691 = vpack.c.b16 %v671, %v667
      %v692 = vpack.c.b16 %v672, %v672
      %v693 = vpack.c.b16 %v673, %v673
      %v694 = vpack.c.b16 %v674, %v674
      %v695 = vpack.c.b16 %v675, %v675
      %v713 = vsel %vm372, %v621, 0
      %v716 = vsel %vm376, %v692, 0
      %v719 = vsel %vm376, %v693, 0
      %v722 = vsel %vm376, %v694, 0
      %v725 = vsel %vm376, %v695, 0
      %727 = vmatpush.bf16.msra.mxu0 0
      %728 = vmatpush.bf16.msra.mxu0 0
      %729 = vmatpush.bf16.msra.mxu0 0
      %730 = vmatpush.bf16.msra.mxu0 %v716
      %731 = vmatpush.bf16.msra.mxu0 %v688
      %732 = vmatpush.bf16.msra.mxu0 %v684
      %733 = vmatpush.bf16.msra.mxu0 %v680
      %734 = vmatpush.bf16.msra.mxu0 %v676
      %735 = vmatmul.bf16.gmra.mxu0 %v713
      %v736 = vpop.f32.mrf.mxu0
      %v737 = vadd.f32 0.0, %v736
      %v738 = vpop.f32.mrf.mxu0
      %739 = vdwg.mxu0
      %740 = vmatpush.bf16.msra.mxu0 0
      %741 = vmatpush.bf16.msra.mxu0 0
      %742 = vmatpush.bf16.msra.mxu0 0
      %743 = vmatpush.bf16.msra.mxu0 %v719
      %744 = vmatpush.bf16.msra.mxu0 %v689
      %745 = vmatpush.bf16.msra.mxu0 %v685
      %746 = vmatpush.bf16.msra.mxu0 %v681
      %747 = vmatpush.bf16.msra.mxu0 %v677
      %748 = vmatmul.bf16.gmra.mxu0 %v713
      %v749 = vpop.f32.mrf.mxu0
      %v750 = vadd.f32 0.0, %v749
      %v751 = vpop.f32.mrf.mxu0
      %752 = vdwg.mxu0
      %753 = vmatpush.bf16.msra.mxu0 0
      %754 = vmatpush.bf16.msra.mxu0 0
      %755 = vmatpush.bf16.msra.mxu0 0
      %756 = vmatpush.bf16.msra.mxu0 %v722
      %757 = vmatpush.bf16.msra.mxu0 %v690
      %758 = vmatpush.bf16.msra.mxu0 %v686
      %759 = vmatpush.bf16.msra.mxu0 %v682
      %760 = vmatpush.bf16.msra.mxu0 %v678
      %761 = vmatmul.bf16.gmra.mxu0 %v713
      %v762 = vpop.f32.mrf.mxu0
      %v763 = vadd.f32 0.0, %v762
      %v764 = vpop.f32.mrf.mxu0
      %765 = vdwg.mxu0
      %766 = vmatpush.bf16.msra.mxu0 0
      %767 = vmatpush.bf16.msra.mxu0 0
      %768 = vmatpush.bf16.msra.mxu0 0
      %769 = vmatpush.bf16.msra.mxu0 %v725
      %770 = vmatpush.bf16.msra.mxu0 %v691
      %771 = vmatpush.bf16.msra.mxu0 %v687
      %772 = vmatpush.bf16.msra.mxu0 %v683
      %773 = vmatpush.bf16.msra.mxu0 %v679
      %774 = vmatmul.bf16.gmra.mxu0 %v713
      %v775 = vpop.f32.mrf.mxu0
      %v776 = vadd.f32 0.0, %v775
      %v777 = vpop.f32.mrf.mxu0
      %778 = vdwg.mxu0
      %v779 = vadd.f32 %v556, %v737
      %v780 = vadd.f32 %v569, %v750
      %v781 = vadd.f32 %v582, %v763
      %v782 = vadd.f32 %v595, %v776
      %v783 = vpack.c.bf16 %v780, %v779
      %v784 = vpack.c.bf16 %v782, %v781
      %785 = vst [vmem:[%s220] sm:$0xff] %v783
      %786 = vst [vmem:[%s220 + $0x8] sm:$0xff] %v784
      %v787 = vrot.slane %v779, 4
      %v788 = vadd.f32 %v779, %v787
      %v789 = vrot.slane %v788, 2
      %v790 = vadd.f32 %v788, %v789
      %v791 = vrot.slane %v790, 1
      %v792 = vadd.f32 %v790, %v791
      %v793 = vrot.slane %v780, 4
      %v794 = vadd.f32 %v780, %v793
      %v795 = vrot.slane %v794, 2
      %v796 = vadd.f32 %v794, %v795
      %v797 = vrot.slane %v796, 1
      %v798 = vadd.f32 %v796, %v797
      %v799 = vrot.slane %v781, 4
      %v800 = vadd.f32 %v781, %v799
      %v801 = vrot.slane %v800, 2
      %v802 = vadd.f32 %v800, %v801
      %v803 = vrot.slane %v802, 1
      %v804 = vadd.f32 %v802, %v803
      %v805 = vrot.slane %v782, 4
      %v806 = vadd.f32 %v782, %v805
      %v807 = vrot.slane %v806, 2
      %v808 = vadd.f32 %v806, %v807
      %v809 = vrot.slane %v808, 1
      %v810 = vadd.f32 %v808, %v809
      %v811 = vmul.f32 %v779, %v779
      %v812 = vmul.f32 %v780, %v780
      %v813 = vmul.f32 %v781, %v781
      %v814 = vmul.f32 %v782, %v782
      %v815 = vrot.slane %v811, 4
      %v816 = vadd.f32 %v811, %v815
      %v817 = vrot.slane %v816, 2
      %v818 = vadd.f32 %v816, %v817
      %v819 = vrot.slane %v818, 1
      %v820 = vadd.f32 %v818, %v819
      %v821 = vrot.slane %v812, 4
      %v822 = vadd.f32 %v812, %v821
      %v823 = vrot.slane %v822, 2
      %v824 = vadd.f32 %v822, %v823
      %v825 = vrot.slane %v824, 1
      %v826 = vadd.f32 %v824, %v825
      %v827 = vrot.slane %v813, 4
      %v828 = vadd.f32 %v813, %v827
      %v829 = vrot.slane %v828, 2
      %v830 = vadd.f32 %v828, %v829
      %v831 = vrot.slane %v830, 1
      %v832 = vadd.f32 %v830, %v831
      %v833 = vrot.slane %v814, 4
      %v834 = vadd.f32 %v814, %v833
      %v835 = vrot.slane %v834, 2
      %v836 = vadd.f32 %v834, %v835
      %v837 = vrot.slane %v836, 1
      %v838 = vadd.f32 %v836, %v837
      %vm839 = vcmask 1040384
      %v840 = vsel %vm839, %v792, %v820
      %v841 = vsel %vm839, %v798, %v826
      %v842 = vsel %vm839, %v804, %v832
      %v843 = vsel %vm839, %v810, %v838
      %v848 = vrot.slane %v841, 6
      %v849 = vrot.slane %v842, 4
      %v850 = vrot.slane %v843, 2
      %vm851 = vcmask 1041408
      %v852 = vsel %vm851, %v840, %v848
      %vm853 = vcmask 1045508
      %v854 = vsel %vm853, %v849, %v850
      %v855 = vsel %vm376, %v852, %v854
      %857 = vst [vmem:[%s229] sm:$0xff] %v855
      %p858 = scmp.lt.s32.totalorder %s19, 1
      %s859 = scalar_select %p858, %s19, 1
      %p860 = scmp.lt.s32.totalorder %s20, 1
      %s861 = scalar_select %p860, %s20, 1
      %s862 = smul.addr %s861, 4
      %s863 = smul.addr %s859, 8
      %s864 = sadd.s32 %s862, %s863
      %s865 = smul.addr %s864, 4
      %s866 = scalar_lea.vmem %s2, %s865
      %p867 = scmp.lt.s32.totalorder %s19, 1
      %s868 = scalar_select %p867, %s19, 1
      %p869 = scmp.lt.s32.totalorder %s20, 1
      %s870 = scalar_select %p869, %s20, 1
      %s871 = smul.addr %s870, 4
      %s872 = smul.addr %s868, 8
      %s873 = sadd.s32 %s871, %s872
      %s874 = smul.addr %s873, 2
      %s875 = scalar_lea.vmem %s3, %s874
      // Predicated region
      $region29: #{upconv_forward.1} parent=27 // pred_check
        %p876 = pneg %p96
      $region30: #{upconv_forward.1} parent=27 // pred_check_branch
        %878 = sbr.rel (%p876) target = $region32
      $region31: #{upconv_forward.1} parent=27 // pred_region
        _
      $region32: #{upconv_forward.1} parent=27 // pred_fallthru
        _
      // Predicated region
      $region33: #{upconv_forward.1} parent=27 // pred_check
        %p879 = pneg %p124
      $region34: #{upconv_forward.1} parent=27 // pred_check_branch
        %881 = sbr.rel (%p879) target = $region36
      $region35: #{upconv_forward.1} parent=27 // pred_region
        _
      $region36: #{upconv_forward.1} parent=27 // pred_fallthru
        _
    $region28: #{upconv_forward.1} parent=5 // pred_fallthru
      _
    %p882 = scmp.le.s32.totalorder 2, %s10
    // Predicated region
    $region37: #{upconv_forward.1} parent=5 // pred_check
      %p883 = pneg %p882
    $region38: #{upconv_forward.1} parent=5 // pred_check_branch
      %885 = sbr.rel (%p883) target = $region40
    $region39: #{upconv_forward.1} parent=5 // pred_region
      %s886 = ssub.s32 %s10, 2
      // Predicated region
      $region41: #{upconv_forward.1} parent=39 // pred_check
        %p887 = pneg %p102
      $region42: #{upconv_forward.1} parent=39 // pred_check_branch
        %889 = sbr.rel (%p887) target = $region44
      $region43: #{upconv_forward.1} parent=39 // pred_region
        %p890 = scmp.lt.s32.totalorder %s21, 1
        %s891 = scalar_select %p890, %s21, 1
        %p892 = scmp.lt.s32.totalorder %s22, 1
        %s893 = scalar_select %p892, %s22, 1
        %s894 = smul.addr %s893, 4
        %s895 = smul.addr %s891, 8
        %s896 = sadd.s32 %s894, %s895
        %s897 = smul.addr %s896, 4
        %s898 = scalar_lea.vmem %s2, %s897
      $region44: #{upconv_forward.1} parent=39 // pred_fallthru
        _
      // Predicated region
      $region45: #{upconv_forward.1} parent=39 // pred_check
        %p899 = pneg %p130
      $region46: #{upconv_forward.1} parent=39 // pred_check_branch
        %901 = sbr.rel (%p899) target = $region48
      $region47: #{upconv_forward.1} parent=39 // pred_region
        %p902 = scmp.lt.s32.totalorder %s21, 1
        %s903 = scalar_select %p902, %s21, 1
        %p904 = scmp.lt.s32.totalorder %s22, 1
        %s905 = scalar_select %p904, %s22, 1
        %s906 = smul.addr %s905, 4
        %s907 = smul.addr %s903, 8
        %s908 = sadd.s32 %s906, %s907
        %s909 = smul.addr %s908, 2
        %s910 = scalar_lea.vmem %s3, %s909
      $region48: #{upconv_forward.1} parent=39 // pred_fallthru
        _
    $region40: #{upconv_forward.1} parent=5 // pred_fallthru
      _
  $region6: #{upconv_forward.1} parent=0 // loop_footer
    %s14 = sadd.s32 1, %s10
  $region7: #{upconv_forward.1} parent=0 // loop_footer_branch
    %9 = sbr.rel target = $region3
  $region8: #{upconv_forward.1} parent=0 // loop_exit
    _

</llo_original>
